<compile_context>
chip_gen: v7x
topology: tpu7x:2x2x1
jax: 0.10.0
libtpu: 0.0.40
codegen_flags: <defaults>
</compile_context>

<pallas_src>
import jax
import jax.numpy as jnp
from jax.experimental import pallas as pl
from jax.experimental.pallas import tpu as pltpu

_SUBLANE = 8          # f32 sublane multiple
_LARGE_BATCH = 512    # switch to a batch grid above this
_TILE_B = 256         # batch tile for the gridded path


def _policy_mlp_kernel(x_ref, w1_ref, b1_ref, w2_ref, b2_ref, w3_ref, b3_ref,
                       logits_ref, probs_ref):
    """Fused 3-layer MLP + softmax over the action logits."""
    x = x_ref[...]                                                # [B, D_in]

    h1 = jnp.dot(x, w1_ref[...],
                 preferred_element_type=jnp.float32) + b1_ref[...]
    h1 = jnp.maximum(h1, 0.0)                                     # [B, H]

    h2 = jnp.dot(h1, w2_ref[...],
                 preferred_element_type=jnp.float32) + b2_ref[...]
    h2 = jnp.maximum(h2, 0.0)                                     # [B, H]

    logits = jnp.dot(h2, w3_ref[...],
                     preferred_element_type=jnp.float32) + b3_ref[...]
    logits_ref[...] = logits.astype(logits_ref.dtype)             # [B, A]

    # Fused softmax: exp goes to the EUP, approximate reciprocal is ~free.
    m = jnp.max(logits, axis=-1, keepdims=True)
    e = jnp.exp(logits - m)
    denom = jnp.sum(e, axis=-1, keepdims=True)
    probs_ref[...] = (e * pl.reciprocal(denom, approx=True)).astype(
        probs_ref.dtype)


def prepare_params(params):
    """One-time layout conversion (do NOT call per forward step).

    PyTorch-convention params (w: [out, in], b: [out]) -> kernel layout
    (w: [in, out], b: [1, out]).  Store these persistently; re-run only after
    an optimizer update of the raw params.
    """
    return {
        "w1": jnp.asarray(params["w1"], jnp.float32).T,
        "b1": jnp.asarray(params["b1"], jnp.float32).reshape(1, -1),
        "w2": jnp.asarray(params["w2"], jnp.float32).T,
        "b2": jnp.asarray(params["b2"], jnp.float32).reshape(1, -1),
        "w3": jnp.asarray(params["w3"], jnp.float32).T,
        "b3": jnp.asarray(params["b3"], jnp.float32).reshape(1, -1),
    }


def _round_up(x, m):
    return (x + m - 1) // m * m


@jax.jit
def policy_network_forward(state, prepared):
    """Fused policy forward.

    state:    [B, D_in] float32
    prepared: output of prepare_params (weights already in [in, out] layout)
    returns:  (logits [B, A], probs [B, A]) — `logits` matches the PyTorch
              module's forward output; `probs` is the fused softmax over it.
    """
    B, D_in = state.shape
    H = prepared["w1"].shape[1]
    A = prepared["w3"].shape[1]

    # Pad batch so the sublane axis is a multiple of 8 (f32 vreg sublanes);
    # padded rows are sliced off before returning.
    if B > _LARGE_BATCH:
        B_pad = _round_up(B, _TILE_B)
    else:
        B_pad = max(_round_up(B, _SUBLANE), _SUBLANE)
    x = state if B_pad == B else jnp.pad(state, ((0, B_pad - B), (0, 0)))

    param_elems = (D_in * H + H) + (H * H + H) + (H * A + A)
    cost = pl.CostEstimate(
        flops=2 * B_pad * (D_in * H + H * H + H * A),
        transcendentals=B_pad * A,                      # fused softmax exp
        bytes_accessed=4 * (B_pad * D_in + param_elems + 2 * B_pad * A),
    )

    out_shapes = (jax.ShapeDtypeStruct((B_pad, A), jnp.float32),
                  jax.ShapeDtypeStruct((B_pad, A), jnp.float32))
    kernel_args = (x, prepared["w1"], prepared["b1"], prepared["w2"],
                   prepared["b2"], prepared["w3"], prepared["b3"])

    if B_pad <= _LARGE_BATCH:
        # Tiny problem: single full-array blocks resident in VMEM (~100 KiB),
        # safe on every generation including v7x's 64 MiB VMEM.
        vmem = pl.BlockSpec(memory_space=pltpu.MemorySpace.VMEM)
        logits, probs = pl.pallas_call(
            _policy_mlp_kernel,
            out_shape=out_shapes,
            in_specs=[vmem] * 7,
            out_specs=(vmem, vmem),
            cost_estimate=cost,
        )(*kernel_args)
    else:
        # Large batch (vectorized envs / rollouts): parallel grid over batch
        # tiles; the small weights stay resident (same block every iteration).
        grid = (B_pad // _TILE_B,)
        x_spec = pl.BlockSpec((_TILE_B, D_in), lambda i: (i, 0))
        out_spec = pl.BlockSpec((_TILE_B, A), lambda i: (i, 0))

        def resident(shape):
            return pl.BlockSpec(shape, lambda i: (0, 0))

        logits, probs = pl.pallas_call(
            _policy_mlp_kernel,
            out_shape=out_shapes,
            grid=grid,
            in_specs=[x_spec,
                      resident((D_in, H)), resident((1, H)),
                      resident((H, H)), resident((1, H)),
                      resident((H, A)), resident((1, A))],
            out_specs=(out_spec, out_spec),
            compiler_params=pltpu.CompilerParams(
                dimension_semantics=("parallel",),
                vmem_limit_bytes=32 * 1024 * 1024),
            cost_estimate=cost,
        )(*kernel_args)

    if B_pad != B:
        logits = logits[:B]
        probs = probs[:B]
    return logits, probs


def init_policy_params(key, input_dim, n_actions, hidden_dim=128):
    """Deterministic init mimicking nn.Linear default (uniform +/- 1/sqrt(fan_in))."""
    def linear_init(k, fan_in, fan_out):
        kw, kb = jax.random.split(k)
        bound = 1.0 / jnp.sqrt(fan_in)
        w = jax.random.uniform(kw, (fan_out, fan_in), jnp.float32, -bound, bound)
        b = jax.random.uniform(kb, (fan_out,), jnp.float32, -bound, bound)
        return w, b

    k1, k2, k3 = jax.random.split(key, 3)
    w1, b1 = linear_init(k1, input_dim, hidden_dim)
    w2, b2 = linear_init(k2, hidden_dim, hidden_dim)
    w3, b3 = linear_init(k3, hidden_dim, n_actions)
    return {"w1": w1, "b1": b1, "w2": w2, "b2": b2, "w3": w3, "b3": b3}


def _reference_forward(state, params):
    h1 = jnp.maximum(state @ params["w1"].T + params["b1"], 0.0)
    h2 = jnp.maximum(h1 @ params["w2"].T + params["b2"], 0.0)
    return h2 @ params["w3"].T + params["b3"]


# TODO(synk): optim.Adam state/updates and Categorical sampling from the agent
# are host/RL glue, not part of the module's forward, and are not ported here.

if __name__ == "__main__":
    key = jax.random.PRNGKey(0)
    k_params, k_state = jax.random.split(key)

    batch = 2
    input_dim = 8        # input_dims = (8,)
    n_actions = 4
    hidden_dim = 128

    params = init_policy_params(k_params, input_dim, n_actions, hidden_dim)
    prepared = prepare_params(params)     # one-time layout conversion
    state = jax.random.normal(k_state, (batch, input_dim), jnp.float32)

    logits, probs = policy_network_forward(state, prepared)
    jax.block_until_ready((logits, probs))

    # Correctness check against a pure-JAX reference.
    ref_logits = _reference_forward(state, params)
    ref_probs = jax.nn.softmax(ref_logits, axis=-1)
    assert logits.shape == (batch, n_actions)
    assert probs.shape == (batch, n_actions)
    assert jnp.allclose(logits, ref_logits, atol=1e-5, rtol=1e-5)
    assert jnp.allclose(probs, ref_probs, atol=1e-3, rtol=1e-3)

    # Also exercise the tiled large-batch path (parallel grid over batch).
    big_state = jax.random.normal(k_state, (1024, input_dim), jnp.float32)
    big_logits, big_probs = policy_network_forward(big_state, prepared)
    jax.block_until_ready((big_logits, big_probs))
    big_ref = _reference_forward(big_state, params)
    assert big_logits.shape == (1024, n_actions)
    assert jnp.allclose(big_logits, big_ref, atol=1e-4, rtol=1e-4)
    assert jnp.allclose(big_probs, jax.nn.softmax(big_ref, axis=-1),
                        atol=1e-3, rtol=1e-3)

    print("KERNEL_OK")
</pallas_src>

<mosaic_0001>
module attributes {stable_mosaic.version = 11 : i64} {
  func.func @_policy_mlp_kernel(%arg0: memref<8x8xf32, #tpu.memory_space<vmem>>, %arg1: memref<8x128xf32, #tpu.memory_space<vmem>>, %arg2: memref<1x128xf32, #tpu.memory_space<vmem>>, %arg3: memref<128x128xf32, #tpu.memory_space<vmem>>, %arg4: memref<1x128xf32, #tpu.memory_space<vmem>>, %arg5: memref<128x4xf32, #tpu.memory_space<vmem>>, %arg6: memref<1x4xf32, #tpu.memory_space<vmem>>, %arg7: memref<8x4xf32, #tpu.memory_space<vmem>>, %arg8: memref<8x4xf32, #tpu.memory_space<vmem>>) attributes {dimension_semantics = [], scalar_prefetch = 0 : i64, scratch_operands = 0 : i64, tpu.core_type = #tpu.core_type<tc>} {
    %c0 = arith.constant 0 : index
    %c0_0 = arith.constant 0 : index
    %0 = vector.load %arg0[%c0, %c0_0] : memref<8x8xf32, #tpu.memory_space<vmem>>, vector<8x8xf32>
    %c0_1 = arith.constant 0 : index
    %c0_2 = arith.constant 0 : index
    %1 = vector.load %arg1[%c0_1, %c0_2] : memref<8x128xf32, #tpu.memory_space<vmem>>, vector<8x128xf32>
    %cst = arith.constant dense<0.000000e+00> : vector<8x128xf32>
    %2 = tpu.matmul %0, %1, %cst {dimension_numbers = #tpu.dot_dimension_numbers<[1], [0], [0], [1], [0, 0, 1, 1], [], []>} : vector<8x8xf32>, vector<8x128xf32>, vector<8x128xf32> -> vector<8x128xf32>
    %c0_3 = arith.constant 0 : index
    %c0_4 = arith.constant 0 : index
    %3 = vector.load %arg2[%c0_3, %c0_4] : memref<1x128xf32, #tpu.memory_space<vmem>>, vector<1x128xf32>
    %4 = vector.broadcast %3 : vector<1x128xf32> to vector<8x128xf32>
    %5 = arith.addf %2, %4 : vector<8x128xf32>
    %cst_5 = arith.constant 0.000000e+00 : f32
    %6 = vector.broadcast %cst_5 : f32 to vector<8x128xf32>
    %7 = arith.maximumf %5, %6 : vector<8x128xf32>
    %c0_6 = arith.constant 0 : index
    %c0_7 = arith.constant 0 : index
    %8 = vector.load %arg3[%c0_6, %c0_7] : memref<128x128xf32, #tpu.memory_space<vmem>>, vector<128x128xf32>
    %cst_8 = arith.constant dense<0.000000e+00> : vector<8x128xf32>
    %9 = tpu.matmul %7, %8, %cst_8 {dimension_numbers = #tpu.dot_dimension_numbers<[1], [0], [0], [1], [0, 0, 1, 1], [], []>} : vector<8x128xf32>, vector<128x128xf32>, vector<8x128xf32> -> vector<8x128xf32>
    %c0_9 = arith.constant 0 : index
    %c0_10 = arith.constant 0 : index
    %10 = vector.load %arg4[%c0_9, %c0_10] : memref<1x128xf32, #tpu.memory_space<vmem>>, vector<1x128xf32>
    %11 = vector.broadcast %10 : vector<1x128xf32> to vector<8x128xf32>
    %12 = arith.addf %9, %11 : vector<8x128xf32>
    %cst_11 = arith.constant 0.000000e+00 : f32
    %13 = vector.broadcast %cst_11 : f32 to vector<8x128xf32>
    %14 = arith.maximumf %12, %13 : vector<8x128xf32>
    %c0_12 = arith.constant 0 : index
    %c0_13 = arith.constant 0 : index
    %15 = vector.load %arg5[%c0_12, %c0_13] : memref<128x4xf32, #tpu.memory_space<vmem>>, vector<128x4xf32>
    %cst_14 = arith.constant dense<0.000000e+00> : vector<8x4xf32>
    %16 = tpu.matmul %14, %15, %cst_14 {dimension_numbers = #tpu.dot_dimension_numbers<[1], [0], [0], [1], [0, 0, 1, 1], [], []>} : vector<8x128xf32>, vector<128x4xf32>, vector<8x4xf32> -> vector<8x4xf32>
    %c0_15 = arith.constant 0 : index
    %c0_16 = arith.constant 0 : index
    %17 = vector.load %arg6[%c0_15, %c0_16] : memref<1x4xf32, #tpu.memory_space<vmem>>, vector<1x4xf32>
    %18 = vector.broadcast %17 : vector<1x4xf32> to vector<8x4xf32>
    %19 = arith.addf %16, %18 : vector<8x4xf32>
    %c0_17 = arith.constant 0 : index
    %c0_18 = arith.constant 0 : index
    %20 = vector.load %arg7[%c0_17, %c0_18] : memref<8x4xf32, #tpu.memory_space<vmem>>, vector<8x4xf32>
    tpu.vector_store %arg7[%c0_17, %c0_18], %19 {strides = array<i32>} : memref<8x4xf32, #tpu.memory_space<vmem>>, vector<8x4xf32>,
    %cst_19 = arith.constant dense<0xFF800000> : vector<8xf32>
    %21 = vector.multi_reduction <maximumf>, %19, %cst_19 [1] : vector<8x4xf32> to vector<8xf32>
    %22 = vector.shape_cast %21 : vector<8xf32> to vector<8x1xf32>
    %23 = vector.broadcast %22 : vector<8x1xf32> to vector<8x4xf32>
    %24 = arith.subf %19, %23 : vector<8x4xf32>
    %25 = math.exp %24 : vector<8x4xf32>
    %cst_20 = arith.constant dense<0.000000e+00> : vector<8xf32>
    %26 = vector.multi_reduction <add>, %25, %cst_20 [1] : vector<8x4xf32> to vector<8xf32>
    %27 = vector.shape_cast %26 : vector<8xf32> to vector<8x1xf32>
    %28 = tpu.reciprocal %27 {approx = true} : vector<8x1xf32> -> vector<8x1xf32>
    %29 = vector.broadcast %28 : vector<8x1xf32> to vector<8x4xf32>
    %30 = arith.mulf %25, %29 : vector<8x4xf32>
    %c0_21 = arith.constant 0 : index
    %c0_22 = arith.constant 0 : index
    %31 = vector.load %arg8[%c0_21, %c0_22] : memref<8x4xf32, #tpu.memory_space<vmem>>, vector<8x4xf32>
    tpu.vector_store %arg8[%c0_21, %c0_22], %30 {strides = array<i32>} : memref<8x4xf32, #tpu.memory_space<vmem>>, vector<8x4xf32>,
    return
  }
}

</mosaic_0001>

<llo_original>
// kernel: policy_network_forward.1
$region0: #{policy_network_forward.1}
  #allocation0 [shape = 'u32[]', space=smem, size = 0x4, offset = 0x4, fixed_abs, tag = 'smem constant byte address 0x4 - core index']
  #allocation1 [shape = 'u32[144,128]{1,0:T(1,128)}', space=vmem, size = 0x12000, scoped, tag = 'internal scratch']
  %s0 = inlined_call_operand.vmem [shape: f32[8,8], index: 0, kind: input, shape index: {}]
  %s1 = inlined_call_operand.vmem [shape: f32[8,128], index: 1, kind: input, shape index: {}]
  %s2 = inlined_call_operand.vmem [shape: f32[1,128], index: 2, kind: input, shape index: {}]
  %s3 = inlined_call_operand.vmem [shape: f32[128,128], index: 3, kind: input, shape index: {}]
  %s4 = inlined_call_operand.vmem [shape: f32[1,128], index: 4, kind: input, shape index: {}]
  %s5 = inlined_call_operand.vmem [shape: f32[128,4], index: 5, kind: input, shape index: {}]
  %s6 = inlined_call_operand.vmem [shape: f32[1,4], index: 6, kind: input, shape index: {}]
  %s7 = inlined_call_operand.vmem [shape: f32[8,4], index: 7, kind: output, shape index: {0}]
  %s8 = inlined_call_operand.vmem [shape: f32[8,4], index: 8, kind: output, shape index: {1}]
  %9 = xla_tuple %s7, %s8
  %s10 = sld [smem:[#allocation0]]
  $region46: #{policy_network_forward.1} parent=0
    _
  %s12 = ssub.s32 1, %s10
  %s13 = scalar_select 0, %s12, %s10
  // Predicated region
  $region2: #{policy_network_forward.1} parent=0 // pred_check
    _
  $region3: #{policy_network_forward.1} parent=0 // pred_check_branch
    %15 = sbr.rel (0) target = $region5
  $region4: #{policy_network_forward.1} parent=0 // pred_region
    _
  $region5: #{policy_network_forward.1} parent=0 // pred_fallthru
    _
  // Predicated region
  $region6: #{policy_network_forward.1} parent=0 // pred_check
    _
  $region7: #{policy_network_forward.1} parent=0 // pred_check_branch
    %17 = sbr.rel (0) target = $region9
  $region8: #{policy_network_forward.1} parent=0 // pred_region
    _
  $region9: #{policy_network_forward.1} parent=0 // pred_fallthru
    _
  // Predicated region
  $region10: #{policy_network_forward.1} parent=0 // pred_check
    _
  $region11: #{policy_network_forward.1} parent=0 // pred_check_branch
    %19 = sbr.rel (0) target = $region13
  $region12: #{policy_network_forward.1} parent=0 // pred_region
    _
  $region13: #{policy_network_forward.1} parent=0 // pred_fallthru
    _
  // Predicated region
  $region14: #{policy_network_forward.1} parent=0 // pred_check
    _
  $region15: #{policy_network_forward.1} parent=0 // pred_check_branch
    %21 = sbr.rel (0) target = $region17
  $region16: #{policy_network_forward.1} parent=0 // pred_region
    _
  $region17: #{policy_network_forward.1} parent=0 // pred_fallthru
    _
  // Predicated region
  $region18: #{policy_network_forward.1} parent=0 // pred_check
    _
  $region19: #{policy_network_forward.1} parent=0 // pred_check_branch
    %23 = sbr.rel (0) target = $region21
  $region20: #{policy_network_forward.1} parent=0 // pred_region
    _
  $region21: #{policy_network_forward.1} parent=0 // pred_fallthru
    _
  // Predicated region
  $region22: #{policy_network_forward.1} parent=0 // pred_check
    _
  $region23: #{policy_network_forward.1} parent=0 // pred_check_branch
    %25 = sbr.rel (0) target = $region25
  $region24: #{policy_network_forward.1} parent=0 // pred_region
    _
  $region25: #{policy_network_forward.1} parent=0 // pred_fallthru
    _
  // Predicated region
  $region26: #{policy_network_forward.1} parent=0 // pred_check
    _
  $region27: #{policy_network_forward.1} parent=0 // pred_check_branch
    %27 = sbr.rel (0) target = $region29
  $region28: #{policy_network_forward.1} parent=0 // pred_region
    _
  $region29: #{policy_network_forward.1} parent=0 // pred_fallthru
    _
  %v28 = vld [vmem:[%s0] sm:$0xff]
  %v29 = vld [vmem:[%s1] sm:$0xff]
  %v30 = vld [vmem:[%s2] sm:$0x1]
  %v32 = vlaneseq
  %v33 = vshrl.u32 %v32, 7
  %v34 = vsub.s32 0, %v33
  %v35 = vrot.slane %v30, %v34
  %vm37 = vcmask 64512
  %v39 = vsel %vm37, %v28, 0
  %41 = vmatprep.subr.mxu0 0.0
  %42 = vmatpush1.msra.mxu0 %v29
  %43 = vmatprep.subr.mxu0 0.0
  %44 = vmatpush1.msra.mxu0 0.0
  %45 = vmatprep.subr.mxu0 0.0
  %46 = vmatpush1.msra.mxu0 0.0
  %47 = vmatprep.subr.mxu0 0.0
  %48 = vmatpush1.msra.mxu0 0.0
  %49 = vmatprep.subr.mxu0 0.0
  %50 = vmatpush1.msra.mxu0 0.0
  %51 = vmatprep.subr.mxu0 0.0
  %52 = vmatpush1.msra.mxu0 0.0
  %53 = vmatprep.subr.mxu0 0.0
  %54 = vmatpush1.msra.mxu0 0.0
  %55 = vmatprep.subr.mxu0 0.0
  %56 = vmatpush1.msra.mxu0 0.0
  %57 = vmatprep.subr.mxu0 0.0
  %58 = vmatpush1.msra.mxu0 0.0
  %59 = vmatprep.subr.mxu0 0.0
  %60 = vmatpush1.msra.mxu0 0.0
  %61 = vmatprep.subr.mxu0 0.0
  %62 = vmatpush1.msra.mxu0 0.0
  %63 = vmatprep.subr.mxu0 0.0
  %64 = vmatpush1.msra.mxu0 0.0
  %65 = vmatprep.subr.mxu0 0.0
  %66 = vmatpush1.msra.mxu0 0.0
  %67 = vmatprep.subr.mxu0 0.0
  %68 = vmatpush1.msra.mxu0 0.0
  %69 = vmatprep.subr.mxu0 0.0
  %70 = vmatpush1.msra.mxu0 0.0
  %71 = vmatprep.subr.mxu0 0.0
  %72 = vmatpush1.msra.mxu0 0.0
  %73 = vmatprep.subr.mxu0 0.0
  %74 = vmatpush1.msra.mxu0 0.0
  %75 = vmatprep.subr.mxu0 0.0
  %76 = vmatpush1.msra.mxu0 0.0
  %77 = vmatprep.subr.mxu0 0.0
  %78 = vmatpush1.msra.mxu0 0.0
  %79 = vmatprep.subr.mxu0 0.0
  %80 = vmatpush1.msra.mxu0 0.0
  %81 = vmatprep.subr.mxu0 0.0
  %82 = vmatpush1.msra.mxu0 0.0
  %83 = vmatprep.subr.mxu0 0.0
  %84 = vmatpush1.msra.mxu0 0.0
  %85 = vmatprep.subr.mxu0 0.0
  %86 = vmatpush1.msra.mxu0 0.0
  %87 = vmatprep.subr.mxu0 0.0
  %88 = vmatpush1.msra.mxu0 0.0
  %89 = vmatprep.subr.mxu0 0.0
  %90 = vmatpush1.msra.mxu0 0.0
  %91 = vmatprep.subr.mxu0 0.0
  %92 = vmatpush1.msra.mxu0 0.0
  %93 = vmatprep.subr.mxu0 0.0
  %94 = vmatpush1.msra.mxu0 0.0
  %95 = vmatprep.subr.mxu0 0.0
  %96 = vmatpush1.msra.mxu0 0.0
  %97 = vmatprep.subr.mxu0 0.0
  %98 = vmatpush1.msra.mxu0 0.0
  %99 = vmatprep.subr.mxu0 0.0
  %100 = vmatpush1.msra.mxu0 0.0
  %101 = vmatprep.subr.mxu0 0.0
  %102 = vmatpush1.msra.mxu0 0.0
  %103 = vmatprep.subr.mxu0 0.0
  %104 = vmatpush1.msra.mxu0 0.0
  %105 = vmatprep.mubr.f32.mxu0 0.0
  %106 = vmatmul.mubr.f32.gmra.mrb[0].mxu0 %v39
  %v107 = vpop.f32.mrb[0].mxu0
  %v108 = vadd.f32 %v35, %v107
  %v109 = vpop.f32.mrb[0].mxu0
  %110 = vdwg.mxu0
  %v111 = vmax.f32 %v108, 0.0
  %v112 = vld [vmem:[%s3] sm:$0xff]
  %v113 = vld [vmem:[%s3 + $0x8] sm:$0xff]
  %v114 = vld [vmem:[%s3 + $0x10] sm:$0xff]
  %v115 = vld [vmem:[%s3 + $0x18] sm:$0xff]
  %v116 = vld [vmem:[%s3 + $0x20] sm:$0xff]
  %v117 = vld [vmem:[%s3 + $0x28] sm:$0xff]
  %v118 = vld [vmem:[%s3 + $0x30] sm:$0xff]
  %v119 = vld [vmem:[%s3 + $0x38] sm:$0xff]
  %v120 = vld [vmem:[%s3 + $0x40] sm:$0xff]
  %v121 = vld [vmem:[%s3 + $0x48] sm:$0xff]
  %v122 = vld [vmem:[%s3 + $0x50] sm:$0xff]
  %v123 = vld [vmem:[%s3 + $0x58] sm:$0xff]
  %v124 = vld [vmem:[%s3 + $0x60] sm:$0xff]
  %v125 = vld [vmem:[%s3 + $0x68] sm:$0xff]
  %v126 = vld [vmem:[%s3 + $0x70] sm:$0xff]
  %v127 = vld [vmem:[%s3 + $0x78] sm:$0xff]
  %v128 = vld [vmem:[%s4] sm:$0x1]
  %v130 = vlaneseq
  %v131 = vshrl.u32 %v130, 7
  %v132 = vsub.s32 0, %v131
  %v133 = vrot.slane %v128, %v132
  %135 = vmatprep.subr.mxu0 0.0
  %136 = vmatpush1.msra.mxu0 %v112
  %137 = vmatprep.subr.mxu0 0.0
  %138 = vmatpush1.msra.mxu0 %v113
  %139 = vmatprep.subr.mxu0 0.0
  %140 = vmatpush1.msra.mxu0 %v114
  %141 = vmatprep.subr.mxu0 0.0
  %142 = vmatpush1.msra.mxu0 %v115
  %143 = vmatprep.subr.mxu0 0.0
  %144 = vmatpush1.msra.mxu0 %v116
  %145 = vmatprep.subr.mxu0 0.0
  %146 = vmatpush1.msra.mxu0 %v117
  %147 = vmatprep.subr.mxu0 0.0
  %148 = vmatpush1.msra.mxu0 %v118
  %149 = vmatprep.subr.mxu0 0.0
  %150 = vmatpush1.msra.mxu0 %v119
  %151 = vmatprep.subr.mxu0 0.0
  %152 = vmatpush1.msra.mxu0 %v120
  %153 = vmatprep.subr.mxu0 0.0
  %154 = vmatpush1.msra.mxu0 %v121
  %155 = vmatprep.subr.mxu0 0.0
  %156 = vmatpush1.msra.mxu0 %v122
  %157 = vmatprep.subr.mxu0 0.0
  %158 = vmatpush1.msra.mxu0 %v123
  %159 = vmatprep.subr.mxu0 0.0
  %160 = vmatpush1.msra.mxu0 %v124
  %161 = vmatprep.subr.mxu0 0.0
  %162 = vmatpush1.msra.mxu0 %v125
  %163 = vmatprep.subr.mxu0 0.0
  %164 = vmatpush1.msra.mxu0 %v126
  %165 = vmatprep.subr.mxu0 0.0
  %166 = vmatpush1.msra.mxu0 %v127
  %167 = vmatprep.subr.mxu0 0.0
  %168 = vmatpush1.msra.mxu0 0.0
  %169 = vmatprep.subr.mxu0 0.0
  %170 = vmatpush1.msra.mxu0 0.0
  %171 = vmatprep.subr.mxu0 0.0
  %172 = vmatpush1.msra.mxu0 0.0
  %173 = vmatprep.subr.mxu0 0.0
  %174 = vmatpush1.msra.mxu0 0.0
  %175 = vmatprep.subr.mxu0 0.0
  %176 = vmatpush1.msra.mxu0 0.0
  %177 = vmatprep.subr.mxu0 0.0
  %178 = vmatpush1.msra.mxu0 0.0
  %179 = vmatprep.subr.mxu0 0.0
  %180 = vmatpush1.msra.mxu0 0.0
  %181 = vmatprep.subr.mxu0 0.0
  %182 = vmatpush1.msra.mxu0 0.0
  %183 = vmatprep.subr.mxu0 0.0
  %184 = vmatpush1.msra.mxu0 0.0
  %185 = vmatprep.subr.mxu0 0.0
  %186 = vmatpush1.msra.mxu0 0.0
  %187 = vmatprep.subr.mxu0 0.0
  %188 = vmatpush1.msra.mxu0 0.0
  %189 = vmatprep.subr.mxu0 0.0
  %190 = vmatpush1.msra.mxu0 0.0
  %191 = vmatprep.subr.mxu0 0.0
  %192 = vmatpush1.msra.mxu0 0.0
  %193 = vmatprep.subr.mxu0 0.0
  %194 = vmatpush1.msra.mxu0 0.0
  %195 = vmatprep.subr.mxu0 0.0
  %196 = vmatpush1.msra.mxu0 0.0
  %197 = vmatprep.subr.mxu0 0.0
  %198 = vmatpush1.msra.mxu0 0.0
  %199 = vmatprep.mubr.f32.mxu0 0.0
  %200 = vmatmul.mubr.f32.gmra.mrb[0].mxu0 %v111
  %v201 = vpop.f32.mrb[0].mxu0
  %v202 = vadd.f32 %v133, %v201
  %v203 = vpop.f32.mrb[0].mxu0
  %204 = vdwg.mxu0
  %v205 = vmax.f32 %v202, 0.0
  %v206 = vld [vmem:[%s5] sm:$0xff]
  %v207 = vld [vmem:[%s5 + $0x8] sm:$0xff]
  %v208 = vld [vmem:[%s5 + $0x10] sm:$0xff]
  %v209 = vld [vmem:[%s5 + $0x18] sm:$0xff]
  %v210 = vld [vmem:[%s5 + $0x20] sm:$0xff]
  %v211 = vld [vmem:[%s5 + $0x28] sm:$0xff]
  %v212 = vld [vmem:[%s5 + $0x30] sm:$0xff]
  %v213 = vld [vmem:[%s5 + $0x38] sm:$0xff]
  %v214 = vld [vmem:[%s5 + $0x40] sm:$0xff]
  %v215 = vld [vmem:[%s5 + $0x48] sm:$0xff]
  %v216 = vld [vmem:[%s5 + $0x50] sm:$0xff]
  %v217 = vld [vmem:[%s5 + $0x58] sm:$0xff]
  %v218 = vld [vmem:[%s5 + $0x60] sm:$0xff]
  %v219 = vld [vmem:[%s5 + $0x68] sm:$0xff]
  %v220 = vld [vmem:[%s5 + $0x70] sm:$0xff]
  %v221 = vld [vmem:[%s5 + $0x78] sm:$0xff]
  %v222 = vld [vmem:[%s6] sm:$0x1]
  %v224 = vlaneseq
  %v225 = vshrl.u32 %v224, 7
  %v226 = vsub.s32 0, %v225
  %v227 = vrot.slane %v222, %v226
  %229 = vmatprep.subr.mxu0 0.0
  %230 = vmatpush1.msra.mxu0 %v206
  %231 = vmatprep.subr.mxu0 0.0
  %232 = vmatpush1.msra.mxu0 %v207
  %233 = vmatprep.subr.mxu0 0.0
  %234 = vmatpush1.msra.mxu0 %v208
  %235 = vmatprep.subr.mxu0 0.0
  %236 = vmatpush1.msra.mxu0 %v209
  %237 = vmatprep.subr.mxu0 0.0
  %238 = vmatpush1.msra.mxu0 %v210
  %239 = vmatprep.subr.mxu0 0.0
  %240 = vmatpush1.msra.mxu0 %v211
  %241 = vmatprep.subr.mxu0 0.0
  %242 = vmatpush1.msra.mxu0 %v212
  %243 = vmatprep.subr.mxu0 0.0
  %244 = vmatpush1.msra.mxu0 %v213
  %245 = vmatprep.subr.mxu0 0.0
  %246 = vmatpush1.msra.mxu0 %v214
  %247 = vmatprep.subr.mxu0 0.0
  %248 = vmatpush1.msra.mxu0 %v215
  %249 = vmatprep.subr.mxu0 0.0
  %250 = vmatpush1.msra.mxu0 %v216
  %251 = vmatprep.subr.mxu0 0.0
  %252 = vmatpush1.msra.mxu0 %v217
  %253 = vmatprep.subr.mxu0 0.0
  %254 = vmatpush1.msra.mxu0 %v218
  %255 = vmatprep.subr.mxu0 0.0
  %256 = vmatpush1.msra.mxu0 %v219
  %257 = vmatprep.subr.mxu0 0.0
  %258 = vmatpush1.msra.mxu0 %v220
  %259 = vmatprep.subr.mxu0 0.0
  %260 = vmatpush1.msra.mxu0 %v221
  %261 = vmatprep.subr.mxu0 0.0
  %262 = vmatpush1.msra.mxu0 0.0
  %263 = vmatprep.subr.mxu0 0.0
  %264 = vmatpush1.msra.mxu0 0.0
  %265 = vmatprep.subr.mxu0 0.0
  %266 = vmatpush1.msra.mxu0 0.0
  %267 = vmatprep.subr.mxu0 0.0
  %268 = vmatpush1.msra.mxu0 0.0
  %269 = vmatprep.subr.mxu0 0.0
  %270 = vmatpush1.msra.mxu0 0.0
  %271 = vmatprep.subr.mxu0 0.0
  %272 = vmatpush1.msra.mxu0 0.0
  %273 = vmatprep.subr.mxu0 0.0
  %274 = vmatpush1.msra.mxu0 0.0
  %275 = vmatprep.subr.mxu0 0.0
  %276 = vmatpush1.msra.mxu0 0.0
  %277 = vmatprep.subr.mxu0 0.0
  %278 = vmatpush1.msra.mxu0 0.0
  %279 = vmatprep.subr.mxu0 0.0
  %280 = vmatpush1.msra.mxu0 0.0
  %281 = vmatprep.subr.mxu0 0.0
  %282 = vmatpush1.msra.mxu0 0.0
  %283 = vmatprep.subr.mxu0 0.0
  %284 = vmatpush1.msra.mxu0 0.0
  %285 = vmatprep.subr.mxu0 0.0
  %286 = vmatpush1.msra.mxu0 0.0
  %287 = vmatprep.subr.mxu0 0.0
  %288 = vmatpush1.msra.mxu0 0.0
  %289 = vmatprep.subr.mxu0 0.0
  %290 = vmatpush1.msra.mxu0 0.0
  %291 = vmatprep.subr.mxu0 0.0
  %292 = vmatpush1.msra.mxu0 0.0
  %293 = vmatprep.mubr.f32.mxu0 0.0
  %294 = vmatmul.mubr.f32.gmra.mrb[0].mxu0 %v205
  %v295 = vpop.f32.mrb[0].mxu0
  %v296 = vadd.f32 %v227, %v295
  %v297 = vpop.f32.mrb[0].mxu0
  %298 = vdwg.mxu0
  %vm299 = vcmask 31744
  %300 = vst.msk [vmem:[%s7] sm:$0xff] %vm299, %v296
  %v301 = vsel %vm299, %v296, -inf
  %302 = vmax.xlane.f32.xlu0 %v301
  %v303 = vpop.xlane.xlu0 %302
  %v304 = vsub.f32 %v296, %v303
  %v305 = vmul.f32 %v304, 1.442695
  %v306 = vpow.pop %v305
  %v307 = vsel %vm299, %v306, 0.0
  %308 = vadd.xlane.f32.xlu0 %v307
  %v309 = vpop.xlane.xlu0 %308
  %v310 = vrcp.pop %v309
  %v311 = vmul.f32 %v306, %v310
  %312 = vst.msk [vmem:[%s8] sm:$0xff] %vm299, %v311
  // Predicated region
  $region30: #{policy_network_forward.1} parent=0 // pred_check
    _
  $region31: #{policy_network_forward.1} parent=0 // pred_check_branch
    %314 = sbr.rel (0) target = $region33
  $region32: #{policy_network_forward.1} parent=0 // pred_region
    _
  $region33: #{policy_network_forward.1} parent=0 // pred_fallthru
    _
  // Predicated region
  $region34: #{policy_network_forward.1} parent=0 // pred_check
    _
  $region35: #{policy_network_forward.1} parent=0 // pred_check_branch
    %316 = sbr.rel (0) target = $region37
  $region36: #{policy_network_forward.1} parent=0 // pred_region
    _
  $region37: #{policy_network_forward.1} parent=0 // pred_fallthru
    _
  // Predicated region
  $region38: #{policy_network_forward.1} parent=0 // pred_check
    _
  $region39: #{policy_network_forward.1} parent=0 // pred_check_branch
    %318 = sbr.rel (0) target = $region41
  $region40: #{policy_network_forward.1} parent=0 // pred_region
    _
  $region41: #{policy_network_forward.1} parent=0 // pred_fallthru
    _
  // Predicated region
  $region42: #{policy_network_forward.1} parent=0 // pred_check
    _
  $region43: #{policy_network_forward.1} parent=0 // pred_check_branch
    %320 = sbr.rel (0) target = $region45
  $region44: #{policy_network_forward.1} parent=0 // pred_region
    _
  $region45: #{policy_network_forward.1} parent=0 // pred_fallthru
    _

</llo_original>
